<compile_context>
chip_gen: v7x
topology: tpu7x:2x2x1
jax: 0.10.0
libtpu: 0.0.40
codegen_flags: <defaults>
</compile_context>

<pallas_src>
import functools

import jax
import jax.numpy as jnp
from jax import lax
from jax.experimental import pallas as pl
from jax.experimental.pallas import tpu as pltpu


def _round_up(x, m):
    return ((x + m - 1) // m) * m


def _vmem_capacity_bytes():
    try:
        info = pltpu.get_tpu_info()
        cap = getattr(info, "vmem_capacity_bytes", None)
        if cap:
            return int(cap)
    except Exception:
        pass
    return 64 * 1024 * 1024  # conservative (v7x-sized) fallback


def _lt3d_kernel(x_ref, wt_ref, b_ref, o_ref, acc_ref, *,
                 inv_s, s_total, ts, needs_mask):
    # x_ref  : (C, TS)   one batch element's channels x spatial chunk
    # wt_ref : (C, F)    conv1x1 weight, transposed
    # b_ref  : (1, F)    conv1x1 bias
    # o_ref  : (1, F)    pooled + projected output row for this batch element
    # acc_ref: (C, 128)  lane-resident f32 spatial-sum accumulator, resident
    #                    across the j (reduction) grid axis
    j = pl.program_id(1)

    @pl.when(j == 0)
    def _init():
        acc_ref[...] = jnp.zeros_like(acc_ref)

    num_full = ts // 128          # static
    rem = ts - num_full * 128     # static; >0 only for a full-extent tile

    c = x_ref.shape[0]
    if needs_mask:
        # Hoisted once (JAX does not CSE broadcast_in_dim inside loops).
        lane = lax.broadcasted_iota(jnp.int32, (c, 128), 1)
        limit = s_total - j * ts          # valid lanes remaining in this tile
    else:
        lane = None
        limit = None

    def _add_slice(k, carry):
        start = pl.multiple_of(k * 128, 128)
        sl = x_ref[:, pl.ds(start, 128)]                   # (C, 128)
        if needs_mask:
            valid = (start + lane) < limit
            sl = jnp.where(valid, sl, jnp.zeros_like(sl))
        acc_ref[...] += sl.astype(jnp.float32)             # VPU add, no XLU
        return carry

    if num_full > 0:
        lax.fori_loop(0, num_full, _add_slice, 0, unroll=min(8, num_full))

    if rem > 0:
        # Only reachable when ts == S (single full-extent tile) and S is not a
        # multiple of 128: fold the static tail into lane 0 (the finalize
        # reduce sums all lanes anyway). Runs once per batch element.
        tail = x_ref[:, num_full * 128:]
        acc_ref[:, 0:1] += jnp.sum(tail, axis=-1, keepdims=True,
                                   dtype=jnp.float32)

    @pl.when(j == pl.num_programs(1) - 1)
    def _finalize():
        # One cross-lane reduce + tiny C->F projection per batch element.
        pooled = jnp.sum(acc_ref[...], axis=-1, keepdims=True) * inv_s  # (C,1)
        out = jnp.sum(pooled * wt_ref[...], axis=0, keepdims=True)      # (1,F)
        o_ref[...] = (out + b_ref[...]).astype(o_ref.dtype)


def linear_transform_3d_forward(x, weight, bias, *, tile_budget_bytes=None):
    """x: (N, C, D, H, W); weight: (F, C, 1, 1, 1); bias: (F,) -> (N, F)."""
    n, c, d, h, w = x.shape
    f = weight.shape[0]
    s = d * h * w

    x3 = x.reshape(n, c, s)
    wt = weight.reshape(f, c).T          # (C, F)
    b2 = bias.reshape(1, f)              # (1, F)

    itemsize = x.dtype.itemsize
    sublane = {4: 8, 2: 16, 1: 32}.get(itemsize, 8)
    c_pad = _round_up(c, sublane)        # padded sublane footprint of a tile

    vmem_cap = _vmem_capacity_bytes()
    small_vmem = vmem_cap <= 64 * 1024 * 1024
    if tile_budget_bytes is None:
        tile_budget_bytes = (16 if small_vmem else 28) * 1024 * 1024

    bytes_per_lane = c_pad * itemsize
    max_lanes = max(128, tile_budget_bytes // bytes_per_lane)

    if s <= max_lanes:
        ts = s                                    # full extent: always legal
    else:
        ts = max(128, (max_lanes // 128) * 128)   # lane-dense 128-multiple

    s_tiles = pl.cdiv(s, ts)
    needs_mask = (s % ts) != 0                    # partial last tile

    # VMEM limit from the padded (sublane, lane) footprint, double-buffered.
    tile_vmem = c_pad * _round_up(ts, 128) * itemsize
    aux = (c_pad * _round_up(f, 128) * 4          # weights
           + 2 * 8 * _round_up(f, 128) * 4        # bias + output
           + c_pad * 128 * 4                      # accumulator
           + (2 << 20))                           # slack
    cap = (48 if small_vmem else 96) * 1024 * 1024
    vmem_limit = int(min(cap, max(16 * 1024 * 1024, 2 * tile_vmem + aux)))

    kernel = functools.partial(
        _lt3d_kernel, inv_s=1.0 / s, s_total=s, ts=ts, needs_mask=needs_mask)

    cost = pl.CostEstimate(
        flops=int(n * (c * s + 2 * c * f + f)),
        transcendentals=0,
        bytes_accessed=int(n * c * s * itemsize + n * f * itemsize
                           + c * f * wt.dtype.itemsize
                           + f * bias.dtype.itemsize),
    )

    out3 = pl.pallas_call(
        kernel,
        # (N, 1, F): trailing two dims at full extent (always a legal block).
        out_shape=jax.ShapeDtypeStruct((n, 1, f), x.dtype),
        grid=(n, s_tiles),
        in_specs=[
            pl.BlockSpec((pl.Squeezed(), c, ts), lambda i, j: (i, 0, j)),
            pl.BlockSpec((c, f), lambda i, j: (0, 0)),
            pl.BlockSpec((1, f), lambda i, j: (0, 0)),
        ],
        out_specs=pl.BlockSpec((pl.Squeezed(), 1, f), lambda i, j: (i, 0, 0)),
        scratch_shapes=[pltpu.VMEM((c, 128), jnp.float32)],
        compiler_params=pltpu.CompilerParams(
            dimension_semantics=("parallel", "arbitrary"),
            vmem_limit_bytes=vmem_limit,
        ),
        cost_estimate=cost,
    )(x3, wt, b2)

    return out3.reshape(n, f)


def linear_transform_3d_reference(x, weight, bias):
    """Pure-JAX reference mirroring the PyTorch module literally."""
    f, c = weight.shape[0], weight.shape[1]
    w2 = weight.reshape(f, c)
    y = jnp.einsum("ncdhw,fc->nfdhw", x, w2) + bias[None, :, None, None, None]
    return jnp.mean(y, axis=(2, 3, 4))


if __name__ == "__main__":
    key = jax.random.PRNGKey(0)

    def _case(case_key, n, c, d, h, w, feat, **kwargs):
        k_x, k_w, k_b = jax.random.split(case_key, 3)
        x = jax.random.normal(k_x, (n, c, d, h, w), dtype=jnp.float32)
        wgt = jax.random.normal(k_w, (feat, c, 1, 1, 1), dtype=jnp.float32) * 0.5
        b = jax.random.normal(k_b, (feat,), dtype=jnp.float32) * 0.1
        out = jax.block_until_ready(
            linear_transform_3d_forward(x, wgt, b, **kwargs))
        ref = linear_transform_3d_reference(x, wgt, b)
        assert out.shape == (n, feat)
        assert jnp.allclose(out, ref, atol=1e-5, rtol=1e-5), "mismatch vs ref"

    keys = jax.random.split(key, 3)
    # Default budget: single full-extent tile, S a multiple of 128 (S=256).
    _case(keys[0], n=2, c=4, d=4, h=8, w=8, feat=32)
    # Forced tiny budget: multi-tile grid + masked partial last tile (S=312).
    _case(keys[1], n=2, c=3, d=3, h=8, w=13, feat=16, tile_budget_bytes=4096)
    # Full-extent tile with a non-128-multiple tail (S=90).
    _case(keys[2], n=1, c=5, d=2, h=5, w=9, feat=8)

    print("KERNEL_OK")
</pallas_src>

<mosaic_0001>
module attributes {stable_mosaic.version = 11 : i64} {
  func.func @_lt3d_kernel(%arg0: i32, %arg1: i32, %arg2: memref<1x4x256xf32, #tpu.memory_space<vmem>>, %arg3: memref<4x32xf32, #tpu.memory_space<vmem>>, %arg4: memref<1x32xf32, #tpu.memory_space<vmem>>, %arg5: memref<1x1x32xf32, #tpu.memory_space<vmem>>, %arg6: memref<4x128xf32, #tpu.memory_space<vmem>>) attributes {dimension_semantics = [#tpu.dimension_semantics<parallel>, #tpu.dimension_semantics<arbitrary>], iteration_bounds = array<i64: 2, 1>, scalar_prefetch = 0 : i64, scratch_operands = 1 : i64, tpu.core_type = #tpu.core_type<tc>, window_params = [{transform_indices = @transform_0, window_bounds = array<i64: 1, 4, 256>}, {pipeline_mode = #tpu.pipeline_mode<synchronous>, transform_indices = @transform_1, window_bounds = array<i64: 4, 32>}, {pipeline_mode = #tpu.pipeline_mode<synchronous>, transform_indices = @transform_2, window_bounds = array<i64: 1, 32>}, {transform_indices = @transform_3, window_bounds = array<i64: 1, 1, 32>}]} {
    %c0_i32 = arith.constant 0 : i32
    %0 = arith.cmpi eq, %arg1, %c0_i32 : i32
    %1 = arith.extui %0 : i1 to i32
    %c0_i32_0 = arith.constant 0 : i32
    %2 = arith.cmpi ne, %1, %c0_i32_0 : i32
    scf.if %2 {
      %cst = arith.constant 0.000000e+00 : f32
      %22 = vector.broadcast %cst : f32 to vector<4x128xf32>
      %c0_16 = arith.constant 0 : index
      %c0_17 = arith.constant 0 : index
      %23 = vector.load %arg6[%c0_16, %c0_17] : memref<4x128xf32, #tpu.memory_space<vmem>>, vector<4x128xf32>
      tpu.vector_store %arg6[%c0_16, %c0_17], %22 {strides = array<i32>} : memref<4x128xf32, #tpu.memory_space<vmem>>, vector<4x128xf32>,
    } else {
    }
    %c0_i32_1 = arith.constant 0 : i32
    %c128_i32 = arith.constant 128 : i32
    %3 = arith.muli %c0_i32_1, %c128_i32 : i32
    %4 = tpu.assume_multiple %3, 128 : i32
    %c0 = arith.constant 0 : index
    %c0_2 = arith.constant 0 : index
    %5 = arith.index_cast %4 : i32 to index
    %6 = vector.load %arg2[%c0, %c0_2, %5] : memref<1x4x256xf32, #tpu.memory_space<vmem>>, vector<1x4x128xf32>
    %7 = vector.shape_cast %6 : vector<1x4x128xf32> to vector<4x128xf32>
    %c0_3 = arith.constant 0 : index
    %c0_4 = arith.constant 0 : index
    %8 = vector.load %arg6[%c0_3, %c0_4] : memref<4x128xf32, #tpu.memory_space<vmem>>, vector<4x128xf32>
    %9 = arith.addf %8, %7 : vector<4x128xf32>
    %c0_5 = arith.constant 0 : index
    %c0_6 = arith.constant 0 : index
    %10 = vector.load %arg6[%c0_5, %c0_6] : memref<4x128xf32, #tpu.memory_space<vmem>>, vector<4x128xf32>
    tpu.vector_store %arg6[%c0_5, %c0_6], %9 {strides = array<i32>} : memref<4x128xf32, #tpu.memory_space<vmem>>, vector<4x128xf32>,
    %c1_i32 = arith.constant 1 : i32
    %c128_i32_7 = arith.constant 128 : i32
    %11 = arith.muli %c1_i32, %c128_i32_7 : i32
    %12 = tpu.assume_multiple %11, 128 : i32
    %c0_8 = arith.constant 0 : index
    %c0_9 = arith.constant 0 : index
    %13 = arith.index_cast %12 : i32 to index
    %14 = vector.load %arg2[%c0_8, %c0_9, %13] : memref<1x4x256xf32, #tpu.memory_space<vmem>>, vector<1x4x128xf32>
    %15 = vector.shape_cast %14 : vector<1x4x128xf32> to vector<4x128xf32>
    %c0_10 = arith.constant 0 : index
    %c0_11 = arith.constant 0 : index
    %16 = vector.load %arg6[%c0_10, %c0_11] : memref<4x128xf32, #tpu.memory_space<vmem>>, vector<4x128xf32>
    %17 = arith.addf %16, %15 : vector<4x128xf32>
    %c0_12 = arith.constant 0 : index
    %c0_13 = arith.constant 0 : index
    %18 = vector.load %arg6[%c0_12, %c0_13] : memref<4x128xf32, #tpu.memory_space<vmem>>, vector<4x128xf32>
    tpu.vector_store %arg6[%c0_12, %c0_13], %17 {strides = array<i32>} : memref<4x128xf32, #tpu.memory_space<vmem>>, vector<4x128xf32>,
    %c2_i32 = arith.constant 2 : i32
    %c0_i32_14 = arith.constant 0 : i32
    %19 = arith.cmpi eq, %arg1, %c0_i32_14 : i32
    %20 = arith.extui %19 : i1 to i32
    %c0_i32_15 = arith.constant 0 : i32
    %21 = arith.cmpi ne, %20, %c0_i32_15 : i32
    scf.if %21 {
      %c0_16 = arith.constant 0 : index
      %c0_17 = arith.constant 0 : index
      %22 = vector.load %arg6[%c0_16, %c0_17] : memref<4x128xf32, #tpu.memory_space<vmem>>, vector<4x128xf32>
      %cst = arith.constant dense<0.000000e+00> : vector<4xf32>
      %23 = vector.multi_reduction <add>, %22, %cst [1] : vector<4x128xf32> to vector<4xf32>
      %24 = vector.shape_cast %23 : vector<4xf32> to vector<4x1xf32>
      %cst_18 = arith.constant 3.906250e-03 : f32
      %25 = vector.broadcast %cst_18 : f32 to vector<4x1xf32>
      %26 = arith.mulf %24, %25 : vector<4x1xf32>
      %c0_19 = arith.constant 0 : index
      %c0_20 = arith.constant 0 : index
      %27 = vector.load %arg3[%c0_19, %c0_20] : memref<4x32xf32, #tpu.memory_space<vmem>>, vector<4x32xf32>
      %28 = vector.broadcast %26 : vector<4x1xf32> to vector<4x32xf32>
      %29 = arith.mulf %28, %27 : vector<4x32xf32>
      %cst_21 = arith.constant dense<0.000000e+00> : vector<32xf32>
      %30 = vector.multi_reduction <add>, %29, %cst_21 [0] : vector<4x32xf32> to vector<32xf32>
      %31 = vector.shape_cast %30 : vector<32xf32> to vector<1x32xf32>
      %c0_22 = arith.constant 0 : index
      %c0_23 = arith.constant 0 : index
      %32 = vector.load %arg4[%c0_22, %c0_23] : memref<1x32xf32, #tpu.memory_space<vmem>>, vector<1x32xf32>
      %33 = arith.addf %31, %32 : vector<1x32xf32>
      %c0_24 = arith.constant 0 : index
      %c0_25 = arith.constant 0 : index
      %c0_26 = arith.constant 0 : index
      %34 = vector.load %arg5[%c0_24, %c0_25, %c0_26] : memref<1x1x32xf32, #tpu.memory_space<vmem>>, vector<1x1x32xf32>
      %35 = vector.shape_cast %34 : vector<1x1x32xf32> to vector<1x32xf32>
      %36 = vector.shape_cast %33 : vector<1x32xf32> to vector<1x1x32xf32>
      tpu.vector_store %arg5[%c0_24, %c0_25, %c0_26], %36 {strides = array<i32>} : memref<1x1x32xf32, #tpu.memory_space<vmem>>, vector<1x1x32xf32>,
    } else {
    }
    return
  }
  func.func @transform_0(%arg0: i32, %arg1: i32) -> (i32, i32, i32) {
    %c0_i32 = arith.constant 0 : i32
    %c0_i32_0 = arith.constant 0 : i32
    return %arg0, %c0_i32, %arg1 : i32, i32, i32
  }
  func.func @transform_1(%arg0: i32, %arg1: i32) -> (i32, i32) {
    %c0_i32 = arith.constant 0 : i32
    %c0_i32_0 = arith.constant 0 : i32
    %c0_i32_1 = arith.constant 0 : i32
    return %c0_i32, %c0_i32_0 : i32, i32
  }
  func.func @transform_2(%arg0: i32, %arg1: i32) -> (i32, i32) {
    %c0_i32 = arith.constant 0 : i32
    %c0_i32_0 = arith.constant 0 : i32
    %c0_i32_1 = arith.constant 0 : i32
    return %c0_i32, %c0_i32_0 : i32, i32
  }
  func.func @transform_3(%arg0: i32, %arg1: i32) -> (i32, i32, i32) {
    %c0_i32 = arith.constant 0 : i32
    %c0_i32_0 = arith.constant 0 : i32
    %c0_i32_1 = arith.constant 0 : i32
    return %arg0, %c0_i32, %c0_i32_0 : i32, i32, i32
  }
}

</mosaic_0001>

<llo_original>
// kernel: tpu_custom_call.1
$region0: #{tpu_custom_call.1}
  #allocation0 [shape = 'u32[]', space=smem, size = 0x4, offset = 0x4, fixed_abs, tag = 'smem constant byte address 0x4 - core index']
  #allocation1 [shape = 'u32[144,128]{1,0:T(1,128)}', space=vmem, size = 0x12000, scoped, tag = 'internal scratch']
  #allocation2 [shape = 'f32[4,128]{1,0:T(4,128)}', space=vmem, size = 0x800, scoped, tag = 'scratch operand']
  %s0 = inlined_call_operand.hbm [shape: f32[2,4,256], index: 0, kind: input, shape index: {}]
  %s1 = inlined_call_operand.hbm [shape: f32[4,32], index: 1, kind: input, shape index: {}]
  %s2 = inlined_call_operand.vmem [shape: f32[1,32], index: 2, kind: input, shape index: {}]
  %s3 = inlined_call_operand.hbm [shape: f32[2,1,32], index: 3, kind: output, shape index: {}]
  %s4 = sld [smem:[#allocation0]]
  $region61: #{tpu_custom_call.1} parent=0
    _
  %s6 = ssub.s32 1, %s4
  %s7 = scalar_select 0, %s6, %s4
  $region1: #{tpu_custom_call.1} parent=0
    #allocation3 [shape = 'u8[8192]{0}', space=vmem, size = 0x2000, scoped, tag = 'input window, operand 0']
    #allocation4 [shape = 's32[2]{0}', space=sflag, size = 0x8, scoped, tag = 'scoped memory for tpu_custom_call.1']
    #allocation5 [shape = 's32[2]{0}', space=sflag, size = 0x8, scoped, tag = 'scoped memory for tpu_custom_call.1']
    #allocation6 [shape = 'u8[2048]{0}', space=vmem, size = 0x800, scoped, tag = 'input window, operand 1, single buffered']
    #allocation7 [shape = 's32[1]{0}', space=sflag, size = 0x4, scoped, tag = 'scoped memory for tpu_custom_call.1']
    #allocation8 [shape = 'u8[1024]{0}', space=vmem, size = 0x400, scoped, tag = 'output window, operand 0']
    %8 = vsyncpa [#allocation4], 0
    %s9 = scalar_lea.sflag [#allocation4], 1
    %10 = vsyncpa %s9, 0
    %11 = vsyncpa [#allocation7], 0
    %12 = vsyncpa [#allocation5], 0
    %s13 = scalar_lea.sflag [#allocation5], 1
    %14 = vsyncpa %s13, 0
    loop: start=0, step=1, limit=4
    $region2: #{tpu_custom_call.1} parent=1 // loop_pre_header
      _
    $region3: #{tpu_custom_call.1} parent=1 // loop_header
      %s16 = sphi 0, %s20
      %p17 = scmp.ge.s32.totalorder %s16, 4
      %s23 = sphi 0, %s35
      %s24 = sphi 0, %s31
      %s25 = sphi 0, %s23
      %s26 = sphi 0, %s24
      %s27 = sphi 0, %s25
      %s28 = sphi 0, %s26
      %s40 = sphi 0, %s42
      %s43 = sphi 0, %s40
      %s44 = sphi 0, %s43
      %s60 = sphi 0, %s44
      %s64 = sphi 0, %s64
      %s66 = sphi 0, %s64
      %s67 = sphi 0, %s66
      %s81 = sphi 0, %s67
      %s85 = sphi 0, %s85
      %s87 = sphi 0, %s85
      %s88 = sphi 0, %s87
      %s102 = sphi 0, %s88
      %s108 = sphi 0, %s110
      %s111 = sphi 0, %s108
      %s112 = sphi 0, %s111
      %s128 = sphi 0, %s112
    $region4: #{tpu_custom_call.1} parent=1 // loop_header_branch
      %19 = sbr.rel (%p17) target = $region8
    $region5: #{tpu_custom_call.1} parent=1 // loop_body
      %s21 = ssub.s32 %s16, 1
      %s22 = ssub.s32 %s16, 2
      %s29 = sadd.s32 1, %s24
      %p30 = scmp.ge.s32.totalorder %s29, 1
      %s31 = scalar_select %p30, 0, %s29
      %s32 = sadd.s32 1, %s23
      %s33 = scalar_select %p30, %s32, %s23
      %p34 = scmp.ge.s32.totalorder %s33, 2
      %s35 = scalar_select %p34, 0, %s33
      %s36 = ssub.s32 %s23, %s35
      %s37 = ssub.s32 %s24, %s31
      %s38 = sor.u32 %s36, %s37
      %p39 = scmp.eq.s32.totalorder %s38, 0
      %s41 = sadd.s32 %s40, 1
      %s42 = scalar_select %p39, %s40, %s41
      %p45 = pneg %p39
      %p46 = scmp.eq.s32.totalorder %s16, 1
      %p47 = por %p45, %p46
      %p48 = scmp.ne.s32.totalorder %s40, %s43
      %p49 = scmp.eq.s32.totalorder %s16, 0
      %p50 = por %p48, %p49
      %p51 = scmp.ne.s32.totalorder %s40, %s43
      %p52 = scmp.eq.s32.totalorder %s21, 1
      %p53 = por %p51, %p52
      %p54 = scmp.ne.s32.totalorder %s43, %s44
      %p55 = scmp.eq.s32.totalorder %s21, 0
      %p56 = por %p54, %p55
      %p57 = scmp.ne.s32.totalorder %s43, %s44
      %p58 = scmp.eq.s32.totalorder %s22, 1
      %p59 = por %p57, %p58
      %p61 = scmp.ne.s32.totalorder %s44, %s60
      %p62 = scmp.eq.s32.totalorder %s22, 0
      %p63 = por %p61, %p62
      %s65 = sadd.s32 %s64, 1
      %p68 = scmp.eq.s32.totalorder %s16, 1
      %p69 = scmp.ne.s32.totalorder %s64, %s66
      %p70 = scmp.eq.s32.totalorder %s16, 0
      %p71 = por %p69, %p70
      %p72 = scmp.ne.s32.totalorder %s64, %s66
      %p73 = scmp.eq.s32.totalorder %s21, 1
      %p74 = por %p72, %p73
      %p75 = scmp.ne.s32.totalorder %s66, %s67
      %p76 = scmp.eq.s32.totalorder %s21, 0
      %p77 = por %p75, %p76
      %p78 = scmp.ne.s32.totalorder %s66, %s67
      %p79 = scmp.eq.s32.totalorder %s22, 1
      %p80 = por %p78, %p79
      %p82 = scmp.ne.s32.totalorder %s67, %s81
      %p83 = scmp.eq.s32.totalorder %s22, 0
      %p84 = por %p82, %p83
      %s86 = sadd.s32 %s85, 1
      %p89 = scmp.eq.s32.totalorder %s16, 1
      %p90 = scmp.ne.s32.totalorder %s85, %s87
      %p91 = scmp.eq.s32.totalorder %s16, 0
      %p92 = por %p90, %p91
      %p93 = scmp.ne.s32.totalorder %s85, %s87
      %p94 = scmp.eq.s32.totalorder %s21, 1
      %p95 = por %p93, %p94
      %p96 = scmp.ne.s32.totalorder %s87, %s88
      %p97 = scmp.eq.s32.totalorder %s21, 0
      %p98 = por %p96, %p97
      %p99 = scmp.ne.s32.totalorder %s87, %s88
      %p100 = scmp.eq.s32.totalorder %s22, 1
      %p101 = por %p99, %p100
      %p103 = scmp.ne.s32.totalorder %s88, %s102
      %p104 = scmp.eq.s32.totalorder %s22, 0
      %p105 = por %p103, %p104
      %s106 = ssub.s32 %s23, %s35
      %p107 = scmp.eq.s32.totalorder %s106, 0
      %s109 = sadd.s32 %s108, 1
      %s110 = scalar_select %p107, %s108, %s109
      %p113 = pneg %p107
      %p114 = scmp.eq.s32.totalorder %s16, 1
      %p115 = por %p113, %p114
      %p116 = scmp.ne.s32.totalorder %s108, %s111
      %p117 = scmp.eq.s32.totalorder %s16, 0
      %p118 = por %p116, %p117
      %p119 = scmp.ne.s32.totalorder %s108, %s111
      %p120 = scmp.eq.s32.totalorder %s21, 1
      %p121 = por %p119, %p120
      %p122 = scmp.ne.s32.totalorder %s111, %s112
      %p123 = scmp.eq.s32.totalorder %s21, 0
      %p124 = por %p122, %p123
      %p125 = scmp.ne.s32.totalorder %s111, %s112
      %p126 = scmp.eq.s32.totalorder %s22, 1
      %p127 = por %p125, %p126
      %p129 = scmp.ne.s32.totalorder %s112, %s128
      %p130 = scmp.eq.s32.totalorder %s22, 0
      %p131 = por %p129, %p130
      %p132 = scmp.le.s32.totalorder 1, %s16
      %p133 = scmp.lt.s32.totalorder %s16, 3
      %p134 = pnand %p132, %p133
      %p135 = pneg %p134
      // Predicated region
      $region9: #{tpu_custom_call.1} parent=5 // pred_check
        _
      $region10: #{tpu_custom_call.1} parent=5 // pred_check_branch
        %137 = sbr.rel (%p134) target = $region12
      $region11: #{tpu_custom_call.1} parent=5 // pred_region
        %s138 = ssub.s32 %s16, 1
        // Predicated region
        $region13: #{tpu_custom_call.1} parent=11 // pred_check
          %p139 = pneg %p77
        $region14: #{tpu_custom_call.1} parent=11 // pred_check_branch
          %141 = sbr.rel (%p139) target = $region16
        $region15: #{tpu_custom_call.1} parent=11 // pred_region
          %s143 = ssub.s32 64, 64
          %144 = vsyncadd [#allocation7], %s143
          %s146 = sshll.u32 [#allocation6], 4
          %s147 = int_to_ptr.vmem [resolvable:$true] %s146
          %149 = dma.hbm_to_vmem [thread:$0]  %s1, 64, %s147, [#allocation7]
        $region16: #{tpu_custom_call.1} parent=11 // pred_fallthru
          _
        // Predicated region
        $region17: #{tpu_custom_call.1} parent=11 // pred_check
          %p150 = pneg %p98
        $region18: #{tpu_custom_call.1} parent=11 // pred_check_branch
          %152 = sbr.rel (%p150) target = $region20
        $region19: #{tpu_custom_call.1} parent=11 // pred_region
          _
        $region20: #{tpu_custom_call.1} parent=11 // pred_fallthru
          _
      $region12: #{tpu_custom_call.1} parent=5 // pred_fallthru
        _
      %p153 = scmp.lt.s32.totalorder %s16, 2
      // Predicated region
      $region21: #{tpu_custom_call.1} parent=5 // pred_check
        %p154 = pneg %p153
      $region22: #{tpu_custom_call.1} parent=5 // pred_check_branch
        %156 = sbr.rel (%p154) target = $region24
      $region23: #{tpu_custom_call.1} parent=5 // pred_region
        // Predicated region
        $region25: #{tpu_custom_call.1} parent=23 // pred_check
          %p157 = pneg %p50
        $region26: #{tpu_custom_call.1} parent=23 // pred_check_branch
          %159 = sbr.rel (%p157) target = $region28
        $region27: #{tpu_custom_call.1} parent=23 // pred_region
          %s160 = sand.u32 %s40, 1
          %s161 = scalar_lea.sflag [#allocation4], %s160
          %s162 = sand.u32 %s40, 1
          %s163 = smul.addr %s162, 8
          %s164 = scalar_lea.vmem [#allocation3], %s163
          %s165 = smul.u32 2, %s24
          %s167 = ssub.s32 128, 128
          %168 = vsyncadd %s161, %s167
          %s169 = smul.addr %s23, 2
          %s170 = sadd.s32 %s165, %s169
          %s171 = smul.addr %s170, 64
          %s172 = scalar_lea.hbm %s0, %s171
          %s174 = sshll.u32 %s164, 4
          %s175 = int_to_ptr.vmem [resolvable:$true] %s174
          %177 = dma.hbm_to_vmem [thread:$0]  %s172, 128, %s175, %s161
        $region28: #{tpu_custom_call.1} parent=23 // pred_fallthru
          _
      $region24: #{tpu_custom_call.1} parent=5 // pred_fallthru
        _
      %p178 = scmp.le.s32.totalorder 1, %s16
      %p179 = scmp.lt.s32.totalorder %s16, 3
      %p180 = pnand %p178, %p179
      %p181 = pneg %p180
      // Predicated region
      $region29: #{tpu_custom_call.1} parent=5 // pred_check
        _
      $region30: #{tpu_custom_call.1} parent=5 // pred_check_branch
        %183 = sbr.rel (%p180) target = $region32
      $region31: #{tpu_custom_call.1} parent=5 // pred_region
        %s184 = ssub.s32 %s16, 1
        %s185 = sand.u32 %s43, 1
        %s186 = scalar_lea.sflag [#allocation4], %s185
        %s187 = sand.u32 %s43, 1
        %s188 = smul.addr %s187, 8
        %s189 = scalar_lea.vmem [#allocation3], %s188
        // Predicated region
        $region33: #{tpu_custom_call.1} parent=31 // pred_check
          %p190 = pneg %p56
        $region34: #{tpu_custom_call.1} parent=31 // pred_check_branch
          %192 = sbr.rel (%p190) target = $region36
        $region35: #{tpu_custom_call.1} parent=31 // pred_region
          %193 = dma.done %s186, 128
        $region36: #{tpu_custom_call.1} parent=31 // pred_fallthru
          _
        // Predicated region
        $region37: #{tpu_custom_call.1} parent=31 // pred_check
          %p194 = pneg %p77
        $region38: #{tpu_custom_call.1} parent=31 // pred_check_branch
          %196 = sbr.rel (%p194) target = $region40
        $region39: #{tpu_custom_call.1} parent=31 // pred_region
          %197 = dma.done [#allocation7], 64
        $region40: #{tpu_custom_call.1} parent=31 // pred_fallthru
          _
        %s198 = sand.u32 %s43, 1
        %s199 = scalar_lea.sflag [#allocation4], %s198
        %s200 = sand.u32 %s43, 1
        %s201 = smul.addr %s200, 8
        %s202 = scalar_lea.vmem [#allocation3], %s201
        %p203 = pneg %p56
        %p204 = pneg %p53
        %p205 = pneg %p77
        %p206 = pneg %p74
        %p207 = pneg %p98
        %p208 = pneg %p95
        %p209 = pneg %p124
        %p210 = pneg %p121
        %s211 = sand.u32 %s111, 1
        %s212 = scalar_lea.sflag [#allocation5], %s211
        %s213 = sand.u32 %s111, 1
        %s214 = scalar_lea.vmem [#allocation8], %s213
        %s215 = smul.u32 2, %s26
        %p216 = scmp.eq.s32.totalorder %s26, 0
        // Predicated region
        $region41: #{tpu_custom_call.1} parent=31 // pred_check
          %p217 = pneg %p216
        $region42: #{tpu_custom_call.1} parent=31 // pred_check_branch
          %219 = sbr.rel (%p217) target = $region44
        $region43: #{tpu_custom_call.1} parent=31 // pred_region
          %220 = vst [vmem:[#allocation2] sm:$0xf] 0.0
        $region44: #{tpu_custom_call.1} parent=31 // pred_fallthru
          _
        %v221 = vld [vmem:[%s189] sm:$0xf]
        %v222 = vld [vmem:[#allocation2] sm:$0xf]
        %v223 = vadd.f32 %v222, %v221
        %224 = vst [vmem:[#allocation2] sm:$0xf] %v223
        %s225 = scalar_lea.vmem %s189, 4 [#allocation3]
        %v226 = vld [vmem:[%s225] sm:$0xf]
        %v227 = vld [vmem:[#allocation2] sm:$0xf]
        %v228 = vadd.f32 %v227, %v226
        %229 = vst [vmem:[#allocation2] sm:$0xf] %v228
        // Predicated region
        $region45: #{tpu_custom_call.1} parent=31 // pred_check
          %p230 = pneg %p216
        $region46: #{tpu_custom_call.1} parent=31 // pred_check_branch
          %232 = sbr.rel (%p230) target = $region48
        $region47: #{tpu_custom_call.1} parent=31 // pred_region
          %v233 = vld [vmem:[#allocation2] sm:$0xf]
          %vm234 = vcmask 1043456
          %v235 = vsel %vm234, %v233, 0.0
          %236 = vadd.xlane.f32.xlu0 %v235
          %v237 = vpop.xlane.xlu0 %236
          %v238 = vmul.f32 %v237, 0.00390625
          %v239 = vld [vmem:[#allocation6] sm:$0xf]
          %v240 = vmul.f32 %v238, %v239
          %vm241 = vcmask 257024
          %v242 = vsel %vm241, %v240, 0.0
          %v243 = vrot.slane %v242, 4
          %v244 = vadd.f32 %v242, %v243
          %v245 = vrot.slane %v244, 2
          %v246 = vadd.f32 %v244, %v245
          %v247 = vrot.slane %v246, 1
          %v248 = vadd.f32 %v246, %v247
          %v249 = vld [vmem:[%s2] sm:$0x1]
          %v250 = vadd.f32 %v248, %v249
          %vm251 = vcmask 253952
          %252 = vst.msk [vmem:[%s214] sm:$0x1] %vm251, %v250
        $region48: #{tpu_custom_call.1} parent=31 // pred_fallthru
          _
        %s253 = sand.u32 %s111, 1
        %s254 = scalar_lea.sflag [#allocation5], %s253
        %s255 = sand.u32 %s111, 1
        %s256 = scalar_lea.vmem [#allocation8], %s255
        // Predicated region
        $region49: #{tpu_custom_call.1} parent=31 // pred_check
          %p257 = pneg %p121
        $region50: #{tpu_custom_call.1} parent=31 // pred_check_branch
          %259 = sbr.rel (%p257) target = $region52
        $region51: #{tpu_custom_call.1} parent=31 // pred_region
          %s261 = ssub.s32 16, 16
          %262 = vsyncadd %s254, %s261
          %s263 = smul.addr %s25, 16
          %s264 = scalar_lea.hbm %s3, %s263
          %s266 = sshll.u32 %s256, 4
          %s267 = int_to_ptr.vmem [resolvable:$true] %s266
          %269 = dma.vmem_to_hbm [thread:$0]  %s267, 16, %s264, %s254
        $region52: #{tpu_custom_call.1} parent=31 // pred_fallthru
          _
      $region32: #{tpu_custom_call.1} parent=5 // pred_fallthru
        _
      %p270 = scmp.le.s32.totalorder 2, %s16
      // Predicated region
      $region53: #{tpu_custom_call.1} parent=5 // pred_check
        %p271 = pneg %p270
      $region54: #{tpu_custom_call.1} parent=5 // pred_check_branch
        %273 = sbr.rel (%p271) target = $region56
      $region55: #{tpu_custom_call.1} parent=5 // pred_region
        %s274 = ssub.s32 %s16, 2
        // Predicated region
        $region57: #{tpu_custom_call.1} parent=55 // pred_check
          %p275 = pneg %p127
        $region58: #{tpu_custom_call.1} parent=55 // pred_check_branch
          %277 = sbr.rel (%p275) target = $region60
        $region59: #{tpu_custom_call.1} parent=55 // pred_region
          %s278 = sand.u32 %s112, 1
          %s279 = scalar_lea.sflag [#allocation5], %s278
          %s280 = sand.u32 %s112, 1
          %s281 = scalar_lea.vmem [#allocation8], %s280
          %282 = dma.done %s279, 16
        $region60: #{tpu_custom_call.1} parent=55 // pred_fallthru
          _
      $region56: #{tpu_custom_call.1} parent=5 // pred_fallthru
        _
    $region6: #{tpu_custom_call.1} parent=1 // loop_footer
      %s20 = sadd.s32 1, %s16
    $region7: #{tpu_custom_call.1} parent=1 // loop_footer_branch
      %15 = sbr.rel target = $region3
    $region8: #{tpu_custom_call.1} parent=1 // loop_exit
      _
    %283 = vsyncpa [#allocation4], 1
    %s284 = scalar_lea.sflag [#allocation4], 1
    %285 = vsyncpa %s284, 1
    %286 = vsyncpa [#allocation7], 1
    %287 = vsyncpa [#allocation5], 1
    %s288 = scalar_lea.sflag [#allocation5], 1
    %289 = vsyncpa %s288, 1

</llo_original>
